<compile_context>
chip_gen: v6e
topology: v6e:2x2x1
jax: 0.10.0
libtpu: 0.0.40
codegen_flags: <defaults>
</compile_context>

<pallas_src>
from typing import NamedTuple

import jax
import jax.numpy as jnp
from jax.experimental import pallas as pl
from jax.experimental.pallas import tpu as pltpu

BN_EPS = 1e-5


def _round_up(v, m):
    return (v + m - 1) // m * m


def _round_down_128(v):
    return max(128, (v // 128) * 128)


def _vmem_physical_bytes():
    try:
        return int(pltpu.get_tpu_info().vmem_capacity_bytes)
    except Exception:
        return 64 * 1024 * 1024  # conservative fallback (v7x per-TC VMEM)


# ----------------------------------------------------------------------------
# Kernels
# ----------------------------------------------------------------------------
def _bn_relu(y, gamma, beta, out_dtype):
    """Folded BatchNorm affine + ReLU on a full (B, tn) f32 tile."""
    inv_b = jnp.float32(1.0 / y.shape[0])
    mu = jnp.sum(y, axis=0, keepdims=True) * inv_b          # (1, tn)
    yc = y - mu
    var = jnp.sum(yc * yc, axis=0, keepdims=True) * inv_b   # biased variance
    scale = gamma * jax.lax.rsqrt(var + BN_EPS)              # rsqrt -> EUP
    z = yc * scale + beta
    return jnp.maximum(z, 0.0).astype(out_dtype)


def _matmul_block(x_ref, w_ref, k):
    # x is either fully resident (nk, B, tk) -> slice leading dim, or a
    # streamed (B, tk) block.
    x_blk = x_ref[k] if len(x_ref.shape) == 3 else x_ref[...]
    return jnp.dot(x_blk, w_ref[...], preferred_element_type=jnp.float32)


def _kernel_out_acc(x_ref, w_ref, gamma_ref, beta_ref, o_ref):
    """f32 output: accumulate directly in the output block (resident over k)."""
    k = pl.program_id(1)
    partial = _matmul_block(x_ref, w_ref, k)

    @pl.when(k == 0)
    def _():
        o_ref[...] = partial

    @pl.when(k > 0)
    def _():
        o_ref[...] += partial

    @pl.when(k == pl.num_programs(1) - 1)
    def _():
        o_ref[...] = _bn_relu(o_ref[...], gamma_ref[...], beta_ref[...],
                              o_ref.dtype)


def _kernel_scratch_acc(x_ref, w_ref, gamma_ref, beta_ref, o_ref, acc_ref):
    """Non-f32 output: accumulate in a f32 VMEM scratch, cast on finalize."""
    k = pl.program_id(1)
    partial = _matmul_block(x_ref, w_ref, k)

    @pl.when(k == 0)
    def _():
        acc_ref[...] = partial

    @pl.when(k > 0)
    def _():
        acc_ref[...] += partial

    @pl.when(k == pl.num_programs(1) - 1)
    def _():
        o_ref[...] = _bn_relu(acc_ref[...], gamma_ref[...], beta_ref[...],
                              o_ref.dtype)


# ----------------------------------------------------------------------------
# Parameter preparation (do this ONCE; cache across forward calls)
# ----------------------------------------------------------------------------
class NNLayerParams(NamedTuple):
    w_p: jax.Array        # (fi_p, fo_p), matmul dtype, padded
    gamma_p: jax.Array    # (1, fo_p) f32
    beta_p: jax.Array     # (1, fo_p) f32
    f_in: int
    f_out: int
    fi_p: int
    fo_p: int
    tk: int
    tn: int
    batch: int
    x_resident: bool
    matmul_dtype: jnp.dtype
    out_dtype: jnp.dtype
    vmem_limit: int


def prepare_nn_layer_params(w, gamma, beta, batch, *,
                            matmul_dtype=jnp.bfloat16, out_dtype=jnp.float32,
                            tn_max=512, tk_max=2048):
    """Pad/cast weights once and pick tiles under the VMEM budget.

    w: (F_in, F_out) -- the nn.Linear weight, stored transposed.
    The Linear bias is mathematically cancelled by the BatchNorm mean
    subtraction (training-mode batch stats) and is therefore not needed.
    """
    F_in, F_out = w.shape
    B = int(batch)
    assert B >= 2, "BatchNorm1d (training mode) needs batch >= 2"

    matmul_dtype = jnp.dtype(matmul_dtype)
    out_dtype = jnp.dtype(out_dtype)
    x_item = matmul_dtype.itemsize
    out_item = out_dtype.itemsize
    acc_item = 0 if out_dtype == jnp.dtype(jnp.float32) else 4

    fi128 = _round_up(F_in, 128)
    fo128 = _round_up(F_out, 128)

    tn = min(_round_up(tn_max, 128), fo128)
    # Keep >= 2 F_out tiles when possible so the "parallel" axis splits across
    # both TensorCores on v7x.
    if fo128 >= 256 and _round_up(fo128, tn) // tn < 2:
        tn = _round_down_128(fo128 // 2)
    tk = min(_round_up(tk_max, 128), fi128)

    cap = int(_vmem_physical_bytes() * 0.85)

    def residency(tk_, tn_, x_res):
        fi_p_ = _round_up(F_in, tk_)
        x_cols = fi_p_ if x_res else tk_
        return (2 * B * x_cols * x_item        # x (double-buffered)
                + 2 * tk_ * tn_ * x_item       # w tile (double-buffered)
                + 2 * B * tn_ * out_item       # out tile (double-buffered)
                + B * tn_ * acc_item           # f32 scratch (non-f32 out only)
                + 4 * tn_ * 4)                 # gamma/beta

    while True:
        if residency(tk, tn, True) <= cap:
            x_resident = True
            break
        if residency(tk, tn, False) <= cap:
            x_resident = False
            break
        if tk > 128:
            tk = _round_down_128(tk // 2)
        elif tn > 128:
            tn = _round_down_128(tn // 2)
        else:
            # TODO(synk): add a two-pass (sum / sum-sq accumulation) variant so
            # very large batches can tile B instead of staying fully resident.
            raise NotImplementedError(
                "batch too large for the single-pass fused Linear+BN+ReLU kernel")

    needed = residency(tk, tn, x_resident)
    vmem_limit = int(min(cap, needed + (8 << 20)))

    fi_p = _round_up(F_in, tk)
    fo_p = _round_up(F_out, tn)

    w = jnp.asarray(w)
    if w.dtype != matmul_dtype:
        w = w.astype(matmul_dtype)
    if (fi_p, fo_p) != (F_in, F_out):
        w = jnp.pad(w, ((0, fi_p - F_in), (0, fo_p - F_out)))

    gamma = jnp.asarray(gamma, jnp.float32).reshape(1, -1)
    beta = jnp.asarray(beta, jnp.float32).reshape(1, -1)
    if fo_p != F_out:
        gamma = jnp.pad(gamma, ((0, 0), (0, fo_p - F_out)), constant_values=1.0)
        beta = jnp.pad(beta, ((0, 0), (0, fo_p - F_out)))

    return NNLayerParams(w, gamma, beta, F_in, F_out, fi_p, fo_p, tk, tn, B,
                         x_resident, matmul_dtype, out_dtype, vmem_limit)


# ----------------------------------------------------------------------------
# Forward
# ----------------------------------------------------------------------------
def nn_layer_forward(x, params: NNLayerParams):
    """Fused Linear -> BatchNorm1d (batch stats) -> ReLU with prepared params."""
    p = params
    B, F_in = x.shape
    assert (B, F_in) == (p.batch, p.f_in), "x shape does not match prepared params"

    x = jnp.asarray(x)
    if x.dtype != p.matmul_dtype:
        x = x.astype(p.matmul_dtype)
    if p.fi_p != F_in:
        x = jnp.pad(x, ((0, 0), (0, p.fi_p - F_in)))

    nk = p.fi_p // p.tk
    nj = p.fo_p // p.tn

    if p.x_resident:
        # (nk, B, tk): one DMA into VMEM, sliced along the leading dim in-kernel.
        x_in = x.reshape(B, nk, p.tk).transpose(1, 0, 2)
        x_spec = pl.BlockSpec((nk, B, p.tk), lambda j, k: (0, 0, 0))
        x_traffic = x_in.size * x_in.dtype.itemsize
    else:
        x_in = x
        x_spec = pl.BlockSpec((B, p.tk), lambda j, k: (0, k))
        x_traffic = x_in.size * x_in.dtype.itemsize * nj  # re-streamed per j tile

    out_is_f32 = p.out_dtype == jnp.dtype(jnp.float32)
    kernel = _kernel_out_acc if out_is_f32 else _kernel_scratch_acc
    scratch = [] if out_is_f32 else [pltpu.VMEM((B, p.tn), jnp.float32)]

    cost = pl.CostEstimate(
        flops=2 * B * p.fi_p * p.fo_p,
        transcendentals=p.fo_p,  # one rsqrt per output feature
        bytes_accessed=(x_traffic
                        + p.w_p.size * p.w_p.dtype.itemsize
                        + (p.gamma_p.size + p.beta_p.size) * 4
                        + B * p.fo_p * p.out_dtype.itemsize),
    )

    out_p = pl.pallas_call(
        kernel,
        out_shape=jax.ShapeDtypeStruct((B, p.fo_p), p.out_dtype),
        grid=(nj, nk),
        in_specs=[
            x_spec,                                          # x
            pl.BlockSpec((p.tk, p.tn), lambda j, k: (k, j)),  # w : K tile, N tile
            pl.BlockSpec((1, p.tn), lambda j, k: (0, j)),     # gamma
            pl.BlockSpec((1, p.tn), lambda j, k: (0, j)),     # beta
        ],
        out_specs=pl.BlockSpec((B, p.tn), lambda j, k: (0, j)),
        scratch_shapes=scratch,
        compiler_params=pltpu.CompilerParams(
            dimension_semantics=("parallel", "arbitrary"),
            vmem_limit_bytes=p.vmem_limit,
        ),
        cost_estimate=cost,
    )(x_in, p.w_p, p.gamma_p, p.beta_p)

    if p.fo_p != p.f_out:
        out_p = out_p[:, :p.f_out]
    return out_p


def nn_layer(x, w, b, gamma, beta, *, matmul_dtype=jnp.bfloat16,
             out_dtype=jnp.float32, tn_max=512, tk_max=2048):
    """One-shot convenience wrapper (prepares params every call).

    `b` (Linear bias) is accepted for interface parity but unused: it cancels
    exactly against the BatchNorm mean subtraction in training mode.
    """
    del b
    params = prepare_nn_layer_params(
        w, gamma, beta, x.shape[0], matmul_dtype=matmul_dtype,
        out_dtype=out_dtype, tn_max=tn_max, tk_max=tk_max)
    return nn_layer_forward(x, params)


def nn_layer_reference(x, w, b, gamma, beta):
    y = x @ w + jnp.asarray(b).reshape(1, -1)
    mu = jnp.mean(y, axis=0, keepdims=True)
    var = jnp.mean((y - mu) ** 2, axis=0, keepdims=True)
    y_hat = (y - mu) / jnp.sqrt(var + BN_EPS)
    z = jnp.asarray(gamma).reshape(1, -1) * y_hat + jnp.asarray(beta).reshape(1, -1)
    return jnp.maximum(z, 0.0)


# TODO(synk): BatchNorm1d running_mean/running_var buffer updates (training-mode
# side effects that do not affect this forward output) are not emitted.

if __name__ == "__main__":
    key = jax.random.PRNGKey(0)

    # (B, F_in, F_out, matmul_dtype, out_dtype, tol)
    cases = [
        (16, 32, 64, jnp.float32, jnp.float32, 1e-3),      # small, exact-parity path
        (8, 200, 72, jnp.float32, jnp.float32, 1e-3),       # padding path
        (32, 512, 384, jnp.bfloat16, jnp.float32, 5e-2),    # bf16 matmul, multi-tile grid
        (16, 256, 256, jnp.bfloat16, jnp.bfloat16, 5e-2),   # bf16 output (scratch acc path)
    ]

    for (B, F_in, F_out, mm_dt, out_dt, tol) in cases:
        key, kx, kw, kb = jax.random.split(key, 4)
        x = jax.random.normal(kx, (B, F_in), dtype=jnp.float32)
        # Linear weight stored transposed as (F_in, F_out).
        w = jax.random.normal(kw, (F_in, F_out), dtype=jnp.float32) / jnp.sqrt(
            jnp.float32(F_in))
        b = jax.random.normal(kb, (F_out,), dtype=jnp.float32) * 0.1
        gamma = jnp.ones((F_out,), dtype=jnp.float32)   # BatchNorm1d default weight
        beta = jnp.zeros((F_out,), dtype=jnp.float32)   # BatchNorm1d default bias

        # Pad/cast the weights ONCE; reuse across forward calls.
        params = prepare_nn_layer_params(w, gamma, beta, B,
                                         matmul_dtype=mm_dt, out_dtype=out_dt)
        out = jax.block_until_ready(nn_layer_forward(x, params))

        ref = nn_layer_reference(x, w, b, gamma, beta)
        out_f32 = out.astype(jnp.float32)
        assert out.shape == (B, F_out)
        assert bool(jnp.all(jnp.isfinite(out_f32)))
        assert jnp.allclose(out_f32, ref, atol=tol, rtol=tol), (
            f"mismatch vs JAX reference for {(B, F_in, F_out, mm_dt, out_dt)}")

    print("KERNEL_OK")
</pallas_src>

<mosaic_0001>
module attributes {stable_mosaic.version = 11 : i64} {
  func.func @_kernel_out_acc(%arg0: i32, %arg1: i32, %arg2: memref<1x16x128xf32, #tpu.memory_space<vmem>>, %arg3: memref<128x128xf32, #tpu.memory_space<vmem>>, %arg4: memref<1x128xf32, #tpu.memory_space<vmem>>, %arg5: memref<1x128xf32, #tpu.memory_space<vmem>>, %arg6: memref<16x128xf32, #tpu.memory_space<vmem>>) attributes {dimension_semantics = [#tpu.dimension_semantics<parallel>, #tpu.dimension_semantics<arbitrary>], iteration_bounds = array<i64: 1, 1>, scalar_prefetch = 0 : i64, scratch_operands = 0 : i64, tpu.core_type = #tpu.core_type<tc>, window_params = [{pipeline_mode = #tpu.pipeline_mode<synchronous>, transform_indices = @transform_0, window_bounds = array<i64: 1, 16, 128>}, {transform_indices = @transform_1, window_bounds = array<i64: 128, 128>}, {transform_indices = @transform_2, window_bounds = array<i64: 1, 128>}, {transform_indices = @transform_3, window_bounds = array<i64: 1, 128>}, {transform_indices = @transform_4, window_bounds = array<i64: 16, 128>}]} {
    %0 = arith.index_cast %arg1 : i32 to index
    %c0 = arith.constant 0 : index
    %c0_0 = arith.constant 0 : index
    %1 = vector.load %arg2[%0, %c0, %c0_0] : memref<1x16x128xf32, #tpu.memory_space<vmem>>, vector<1x16x128xf32>
    %2 = vector.shape_cast %1 : vector<1x16x128xf32> to vector<16x128xf32>
    %c0_1 = arith.constant 0 : index
    %c0_2 = arith.constant 0 : index
    %3 = vector.load %arg3[%c0_1, %c0_2] : memref<128x128xf32, #tpu.memory_space<vmem>>, vector<128x128xf32>
    %cst = arith.constant dense<0.000000e+00> : vector<16x128xf32>
    %4 = tpu.matmul %2, %3, %cst {dimension_numbers = #tpu.dot_dimension_numbers<[1], [0], [0], [1], [0, 0, 1, 1], [], []>} : vector<16x128xf32>, vector<128x128xf32>, vector<16x128xf32> -> vector<16x128xf32>
    %c0_i32 = arith.constant 0 : i32
    %5 = arith.cmpi eq, %arg1, %c0_i32 : i32
    %6 = arith.extui %5 : i1 to i32
    %c0_i32_3 = arith.constant 0 : i32
    %7 = arith.cmpi ne, %6, %c0_i32_3 : i32
    scf.if %7 {
      %c0_8 = arith.constant 0 : index
      %c0_9 = arith.constant 0 : index
      %14 = vector.load %arg6[%c0_8, %c0_9] : memref<16x128xf32, #tpu.memory_space<vmem>>, vector<16x128xf32>
      tpu.vector_store %arg6[%c0_8, %c0_9], %4 {strides = array<i32>} : memref<16x128xf32, #tpu.memory_space<vmem>>, vector<16x128xf32>,
    } else {
    }
    %c0_i32_4 = arith.constant 0 : i32
    %8 = arith.cmpi sgt, %arg1, %c0_i32_4 : i32
    %9 = arith.extui %8 : i1 to i32
    %c0_i32_5 = arith.constant 0 : i32
    %10 = arith.cmpi ne, %9, %c0_i32_5 : i32
    scf.if %10 {
      %c0_8 = arith.constant 0 : index
      %c0_9 = arith.constant 0 : index
      %14 = vector.load %arg6[%c0_8, %c0_9] : memref<16x128xf32, #tpu.memory_space<vmem>>, vector<16x128xf32>
      %15 = arith.addf %14, %4 : vector<16x128xf32>
      %c0_10 = arith.constant 0 : index
      %c0_11 = arith.constant 0 : index
      %16 = vector.load %arg6[%c0_10, %c0_11] : memref<16x128xf32, #tpu.memory_space<vmem>>, vector<16x128xf32>
      tpu.vector_store %arg6[%c0_10, %c0_11], %15 {strides = array<i32>} : memref<16x128xf32, #tpu.memory_space<vmem>>, vector<16x128xf32>,
    } else {
    }
    %c0_i32_6 = arith.constant 0 : i32
    %11 = arith.cmpi eq, %arg1, %c0_i32_6 : i32
    %12 = arith.extui %11 : i1 to i32
    %c0_i32_7 = arith.constant 0 : i32
    %13 = arith.cmpi ne, %12, %c0_i32_7 : i32
    scf.if %13 {
      %c0_8 = arith.constant 0 : index
      %c0_9 = arith.constant 0 : index
      %14 = vector.load %arg6[%c0_8, %c0_9] : memref<16x128xf32, #tpu.memory_space<vmem>>, vector<16x128xf32>
      %c0_10 = arith.constant 0 : index
      %c0_11 = arith.constant 0 : index
      %15 = vector.load %arg4[%c0_10, %c0_11] : memref<1x128xf32, #tpu.memory_space<vmem>>, vector<1x128xf32>
      %c0_12 = arith.constant 0 : index
      %c0_13 = arith.constant 0 : index
      %16 = vector.load %arg5[%c0_12, %c0_13] : memref<1x128xf32, #tpu.memory_space<vmem>>, vector<1x128xf32>
      %cst_14 = arith.constant dense<0.000000e+00> : vector<128xf32>
      %17 = vector.multi_reduction <add>, %14, %cst_14 [0] : vector<16x128xf32> to vector<128xf32>
      %18 = vector.shape_cast %17 : vector<128xf32> to vector<1x128xf32>
      %cst_15 = arith.constant 6.250000e-02 : f32
      %19 = vector.broadcast %cst_15 : f32 to vector<1x128xf32>
      %20 = arith.mulf %18, %19 : vector<1x128xf32>
      %21 = vector.broadcast %20 : vector<1x128xf32> to vector<16x128xf32>
      %22 = arith.subf %14, %21 : vector<16x128xf32>
      %23 = arith.mulf %22, %22 : vector<16x128xf32>
      %cst_16 = arith.constant dense<0.000000e+00> : vector<128xf32>
      %24 = vector.multi_reduction <add>, %23, %cst_16 [0] : vector<16x128xf32> to vector<128xf32>
      %25 = vector.shape_cast %24 : vector<128xf32> to vector<1x128xf32>
      %cst_17 = arith.constant 6.250000e-02 : f32
      %26 = vector.broadcast %cst_17 : f32 to vector<1x128xf32>
      %27 = arith.mulf %25, %26 : vector<1x128xf32>
      %cst_18 = arith.constant 9.99999974E-6 : f32
      %28 = vector.broadcast %cst_18 : f32 to vector<1x128xf32>
      %29 = arith.addf %27, %28 : vector<1x128xf32>
      %30 = math.rsqrt %29 : vector<1x128xf32>
      %31 = arith.mulf %15, %30 : vector<1x128xf32>
      %32 = vector.broadcast %31 : vector<1x128xf32> to vector<16x128xf32>
      %33 = arith.mulf %22, %32 : vector<16x128xf32>
      %34 = vector.broadcast %16 : vector<1x128xf32> to vector<16x128xf32>
      %35 = arith.addf %33, %34 : vector<16x128xf32>
      %cst_19 = arith.constant 0.000000e+00 : f32
      %36 = vector.broadcast %cst_19 : f32 to vector<16x128xf32>
      %37 = arith.maximumf %35, %36 : vector<16x128xf32>
      %c0_20 = arith.constant 0 : index
      %c0_21 = arith.constant 0 : index
      %38 = vector.load %arg6[%c0_20, %c0_21] : memref<16x128xf32, #tpu.memory_space<vmem>>, vector<16x128xf32>
      tpu.vector_store %arg6[%c0_20, %c0_21], %37 {strides = array<i32>} : memref<16x128xf32, #tpu.memory_space<vmem>>, vector<16x128xf32>,
    } else {
    }
    return
  }
  func.func @transform_0(%arg0: i32, %arg1: i32) -> (i32, i32, i32) {
    %c0_i32 = arith.constant 0 : i32
    %c0_i32_0 = arith.constant 0 : i32
    %c0_i32_1 = arith.constant 0 : i32
    %c0_i32_2 = arith.constant 0 : i32
    return %c0_i32, %c0_i32_0, %c0_i32_1 : i32, i32, i32
  }
  func.func @transform_1(%arg0: i32, %arg1: i32) -> (i32, i32) {
    %c0_i32 = arith.constant 0 : i32
    return %arg1, %arg0 : i32, i32
  }
  func.func @transform_2(%arg0: i32, %arg1: i32) -> (i32, i32) {
    %c0_i32 = arith.constant 0 : i32
    %c0_i32_0 = arith.constant 0 : i32
    return %c0_i32, %arg0 : i32, i32
  }
  func.func @transform_3(%arg0: i32, %arg1: i32) -> (i32, i32) {
    %c0_i32 = arith.constant 0 : i32
    %c0_i32_0 = arith.constant 0 : i32
    return %c0_i32, %arg0 : i32, i32
  }
  func.func @transform_4(%arg0: i32, %arg1: i32) -> (i32, i32) {
    %c0_i32 = arith.constant 0 : i32
    %c0_i32_0 = arith.constant 0 : i32
    return %c0_i32, %arg0 : i32, i32
  }
}

</mosaic_0001>

<llo_original>
// kernel: tpu_custom_call.1
$region0: #{tpu_custom_call.1}
  #allocation0 [shape = 'u32[]', space=smem, size = 0x4, offset = 0x4, fixed_abs, tag = 'smem constant byte address 0x4 - core index']
  #allocation1 [shape = 'u32[144,128]{1,0:T(1,128)}', space=vmem, size = 0x12000, scoped, tag = 'internal scratch']
  %s0 = inlined_call_operand.hbm [shape: f32[1,16,128], index: 0, kind: input, shape index: {}]
  %s1 = inlined_call_operand.hbm [shape: f32[128,128], index: 1, kind: input, shape index: {}]
  %s2 = inlined_call_operand.vmem [shape: f32[1,128], index: 2, kind: input, shape index: {}]
  %s3 = inlined_call_operand.vmem [shape: f32[1,128], index: 3, kind: input, shape index: {}]
  %s4 = inlined_call_operand.hbm [shape: f32[16,128], index: 4, kind: output, shape index: {}]
  %s5 = sld [smem:[#allocation0]]
  $region46: #{tpu_custom_call.1} parent=0
    _
  %s7 = ssub.s32 1, %s5
  %s8 = scalar_select 0, %s7, %s5
  $region1: #{tpu_custom_call.1} parent=0
    #allocation2 [shape = 'u8[8192]{0}', space=vmem, size = 0x2000, scoped, tag = 'input window, operand 0, single buffered']
    #allocation3 [shape = 's32[1]{0}', space=sflag, size = 0x4, scoped, tag = 'scoped memory for tpu_custom_call.1']
    #allocation4 [shape = 's32[1]{0}', space=sflag, size = 0x4, scoped, tag = 'scoped memory for tpu_custom_call.1']
    #allocation5 [shape = 'u8[65536]{0}', space=vmem, size = 0x10000, scoped, tag = 'input window, operand 1, single buffered']
    #allocation6 [shape = 's32[1]{0}', space=sflag, size = 0x4, scoped, tag = 'scoped memory for tpu_custom_call.1']
    #allocation7 [shape = 'u8[8192]{0}', space=vmem, size = 0x2000, scoped, tag = 'output window, operand 0, single buffered']
    %9 = vsyncpa [#allocation3], 0
    %10 = vsyncpa [#allocation6], 0
    %11 = vsyncpa [#allocation4], 0
    // Predicated region
    $region2: #{tpu_custom_call.1} parent=1 // pred_check
      _
    $region3: #{tpu_custom_call.1} parent=1 // pred_check_branch
      %13 = sbr.rel (0) target = $region5
    $region4: #{tpu_custom_call.1} parent=1 // pred_region
      %s15 = ssub.s32 256, 256
      %16 = vsyncadd [#allocation3], %s15
      %s17 = sshll.u32 [#allocation2], 4
      %s18 = int_to_ptr.vmem [resolvable:$true] %s17
      %23 = dma.hbm_to_vmem [thread:$0]  %s0, 256, %s18, [#allocation3], 128, 128, 8
    $region5: #{tpu_custom_call.1} parent=1 // pred_fallthru
      _
    // Predicated region
    $region6: #{tpu_custom_call.1} parent=1 // pred_check
      _
    $region7: #{tpu_custom_call.1} parent=1 // pred_check_branch
      %25 = sbr.rel (0) target = $region9
    $region8: #{tpu_custom_call.1} parent=1 // pred_region
      %s27 = ssub.s32 2048, 2048
      %28 = vsyncadd [#allocation6], %s27
      %s29 = sshll.u32 [#allocation5], 4
      %s30 = int_to_ptr.vmem [resolvable:$true] %s29
      %35 = dma.hbm_to_vmem [thread:$0]  %s1, 2048, %s30, [#allocation6], 128, 128, 8
    $region9: #{tpu_custom_call.1} parent=1 // pred_fallthru
      _
    // Predicated region
    $region10: #{tpu_custom_call.1} parent=1 // pred_check
      _
    $region11: #{tpu_custom_call.1} parent=1 // pred_check_branch
      %37 = sbr.rel (0) target = $region13
    $region12: #{tpu_custom_call.1} parent=1 // pred_region
      _
    $region13: #{tpu_custom_call.1} parent=1 // pred_fallthru
      _
    // Predicated region
    $region14: #{tpu_custom_call.1} parent=1 // pred_check
      _
    $region15: #{tpu_custom_call.1} parent=1 // pred_check_branch
      %39 = sbr.rel (0) target = $region17
    $region16: #{tpu_custom_call.1} parent=1 // pred_region
      _
    $region17: #{tpu_custom_call.1} parent=1 // pred_fallthru
      _
    // Predicated region
    $region18: #{tpu_custom_call.1} parent=1 // pred_check
      _
    $region19: #{tpu_custom_call.1} parent=1 // pred_check_branch
      %41 = sbr.rel (0) target = $region21
    $region20: #{tpu_custom_call.1} parent=1 // pred_region
      %42 = dma.done [#allocation3], 256
    $region21: #{tpu_custom_call.1} parent=1 // pred_fallthru
      _
    // Predicated region
    $region22: #{tpu_custom_call.1} parent=1 // pred_check
      _
    $region23: #{tpu_custom_call.1} parent=1 // pred_check_branch
      %44 = sbr.rel (0) target = $region25
    $region24: #{tpu_custom_call.1} parent=1 // pred_region
      %45 = dma.done [#allocation6], 2048
    $region25: #{tpu_custom_call.1} parent=1 // pred_fallthru
      _
    %s46 = smul.u32 0, 16
    %s47 = scalar_lea.vmem [#allocation2], %s46
    %v48 = vld [vmem:[%s47] sm:$0xff]
    %v49 = vld [vmem:[%s47 + $0x8] sm:$0xff]
    %v50 = vld [vmem:[#allocation5] sm:$0xff]
    %v51 = vld [vmem:[#allocation5 + $0x8] sm:$0xff]
    %v52 = vld [vmem:[#allocation5 + $0x10] sm:$0xff]
    %v53 = vld [vmem:[#allocation5 + $0x18] sm:$0xff]
    %v54 = vld [vmem:[#allocation5 + $0x20] sm:$0xff]
    %v55 = vld [vmem:[#allocation5 + $0x28] sm:$0xff]
    %v56 = vld [vmem:[#allocation5 + $0x30] sm:$0xff]
    %v57 = vld [vmem:[#allocation5 + $0x38] sm:$0xff]
    %v58 = vld [vmem:[#allocation5 + $0x40] sm:$0xff]
    %v59 = vld [vmem:[#allocation5 + $0x48] sm:$0xff]
    %v60 = vld [vmem:[#allocation5 + $0x50] sm:$0xff]
    %v61 = vld [vmem:[#allocation5 + $0x58] sm:$0xff]
    %v62 = vld [vmem:[#allocation5 + $0x60] sm:$0xff]
    %v63 = vld [vmem:[#allocation5 + $0x68] sm:$0xff]
    %v64 = vld [vmem:[#allocation5 + $0x70] sm:$0xff]
    %v65 = vld [vmem:[#allocation5 + $0x78] sm:$0xff]
    %66 = vmatprep.subr.mxu0 0.0
    %67 = vmatpush1.msra.mxu0 %v65
    %68 = vmatprep.subr.mxu0 0.0
    %69 = vmatpush1.msra.mxu0 %v64
    %70 = vmatprep.subr.mxu0 0.0
    %71 = vmatpush1.msra.mxu0 %v63
    %72 = vmatprep.subr.mxu0 0.0
    %73 = vmatpush1.msra.mxu0 %v62
    %74 = vmatprep.subr.mxu0 0.0
    %75 = vmatpush1.msra.mxu0 %v61
    %76 = vmatprep.subr.mxu0 0.0
    %77 = vmatpush1.msra.mxu0 %v60
    %78 = vmatprep.subr.mxu0 0.0
    %79 = vmatpush1.msra.mxu0 %v59
    %80 = vmatprep.subr.mxu0 0.0
    %81 = vmatpush1.msra.mxu0 %v58
    %82 = vmatprep.subr.mxu0 0.0
    %83 = vmatpush1.msra.mxu0 %v57
    %84 = vmatprep.subr.mxu0 0.0
    %85 = vmatpush1.msra.mxu0 %v56
    %86 = vmatprep.subr.mxu0 0.0
    %87 = vmatpush1.msra.mxu0 %v55
    %88 = vmatprep.subr.mxu0 0.0
    %89 = vmatpush1.msra.mxu0 %v54
    %90 = vmatprep.subr.mxu0 0.0
    %91 = vmatpush1.msra.mxu0 %v53
    %92 = vmatprep.subr.mxu0 0.0
    %93 = vmatpush1.msra.mxu0 %v52
    %94 = vmatprep.subr.mxu0 0.0
    %95 = vmatpush1.msra.mxu0 %v51
    %96 = vmatprep.subr.mxu0 0.0
    %97 = vmatpush1.msra.mxu0 %v50
    %98 = vmatprep.subr.mxu0 0.0
    %99 = vmatpush2.msra.mxu0 0.0
    %100 = vmatprep.subr.mxu0 0.0
    %101 = vmatpush2.msra.mxu0 0.0
    %102 = vmatprep.subr.mxu0 0.0
    %103 = vmatpush2.msra.mxu0 0.0
    %104 = vmatprep.subr.mxu0 0.0
    %105 = vmatpush2.msra.mxu0 0.0
    %106 = vmatprep.subr.mxu0 0.0
    %107 = vmatpush2.msra.mxu0 0.0
    %108 = vmatprep.subr.mxu0 0.0
    %109 = vmatpush2.msra.mxu0 0.0
    %110 = vmatprep.subr.mxu0 0.0
    %111 = vmatpush2.msra.mxu0 0.0
    %112 = vmatprep.subr.mxu0 0.0
    %113 = vmatpush2.msra.mxu0 0.0
    %114 = vmatprep.subr.mxu0 0.0
    %115 = vmatpush2.msra.mxu0 0.0
    %116 = vmatprep.subr.mxu0 0.0
    %117 = vmatpush2.msra.mxu0 0.0
    %118 = vmatprep.subr.mxu0 0.0
    %119 = vmatpush2.msra.mxu0 0.0
    %120 = vmatprep.subr.mxu0 0.0
    %121 = vmatpush2.msra.mxu0 0.0
    %122 = vmatprep.subr.mxu0 0.0
    %123 = vmatpush2.msra.mxu0 0.0
    %124 = vmatprep.subr.mxu0 0.0
    %125 = vmatpush2.msra.mxu0 0.0
    %126 = vmatprep.subr.mxu0 0.0
    %127 = vmatpush2.msra.mxu0 0.0
    %128 = vmatprep.subr.mxu0 0.0
    %129 = vmatpush2.msra.mxu0 0.0
    %130 = vmatprep.mubr.f32.mxu0 0.0
    %131 = vmatmul.mubr.f32.gmra.mxu0 %v48
    %v132 = vpop.f32.mrf.mxu0
    %v133 = vadd.f32 0.0, %v132
    %v134 = vpop.f32.mrf.mxu0
    %135 = vmatprep.mubr.f32.mxu0 0.0
    %136 = vmatmul.mubr.f32.gmra.mxu0 %v49
    %v137 = vpop.f32.mrf.mxu0
    %v138 = vadd.f32 0.0, %v137
    %v139 = vpop.f32.mrf.mxu0
    %140 = vdwg.mxu0
    %p141 = scmp.eq.s32.totalorder 0, 0
    // Predicated region
    $region26: #{tpu_custom_call.1} parent=1 // pred_check
      %p142 = pneg %p141
    $region27: #{tpu_custom_call.1} parent=1 // pred_check_branch
      %144 = sbr.rel (%p142) target = $region29
    $region28: #{tpu_custom_call.1} parent=1 // pred_region
      %145 = vst [vmem:[#allocation7] sm:$0xff] %v133
      %146 = vst [vmem:[#allocation7 + $0x8] sm:$0xff] %v138
    $region29: #{tpu_custom_call.1} parent=1 // pred_fallthru
      _
    %p147 = scmp.gt.s32.totalorder 0, 0
    // Predicated region
    $region30: #{tpu_custom_call.1} parent=1 // pred_check
      %p148 = pneg %p147
    $region31: #{tpu_custom_call.1} parent=1 // pred_check_branch
      %150 = sbr.rel (%p148) target = $region33
    $region32: #{tpu_custom_call.1} parent=1 // pred_region
      %v151 = vld [vmem:[#allocation7] sm:$0xff]
      %v152 = vld [vmem:[#allocation7 + $0x8] sm:$0xff]
      %v153 = vadd.f32 %v151, %v133
      %v154 = vadd.f32 %v152, %v138
      %155 = vst [vmem:[#allocation7] sm:$0xff] %v153
      %156 = vst [vmem:[#allocation7 + $0x8] sm:$0xff] %v154
    $region33: #{tpu_custom_call.1} parent=1 // pred_fallthru
      _
    // Predicated region
    $region34: #{tpu_custom_call.1} parent=1 // pred_check
      %p157 = pneg %p141
    $region35: #{tpu_custom_call.1} parent=1 // pred_check_branch
      %159 = sbr.rel (%p157) target = $region37
    $region36: #{tpu_custom_call.1} parent=1 // pred_region
      %v160 = vld [vmem:[#allocation7] sm:$0xff]
      %v161 = vld [vmem:[#allocation7 + $0x8] sm:$0xff]
      %v162 = vld [vmem:[%s2] sm:$0x1]
      %v163 = vld [vmem:[%s3] sm:$0x1]
      %v164 = vadd.f32 %v160, %v161
      %v165 = vrot.slane %v164, 4
      %v166 = vadd.f32 %v164, %v165
      %v167 = vrot.slane %v166, 2
      %v168 = vadd.f32 %v166, %v167
      %v169 = vrot.slane %v168, 1
      %v170 = vadd.f32 %v168, %v169
      %v171 = vmul.f32 %v170, 0.0625
      %v172 = vsub.f32 %v160, %v171
      %v173 = vsub.f32 %v161, %v171
      %v174 = vmul.f32 %v172, %v172
      %v175 = vmul.f32 %v173, %v173
      %v176 = vadd.f32 %v174, %v175
      %v177 = vrot.slane %v176, 4
      %v178 = vadd.f32 %v176, %v177
      %v179 = vrot.slane %v178, 2
      %v180 = vadd.f32 %v178, %v179
      %v181 = vrot.slane %v180, 1
      %v182 = vadd.f32 %v180, %v181
      %v183 = vmul.f32 %v182, 0.0625
      %v184 = vadd.f32 %v183, 1e-05
      %v185 = vrsqrt.pop %v184
      %v186 = vmul.f32 %v162, %v185
      %v188 = vlaneseq
      %v189 = vshrl.u32 %v188, 7
      %v190 = vsub.s32 0, %v189
      %v191 = vrot.slane %v186, %v190
      %v193 = vmul.f32 %v172, %v191
      %v194 = vmul.f32 %v173, %v191
      %v196 = vlaneseq
      %v197 = vshrl.u32 %v196, 7
      %v198 = vsub.s32 0, %v197
      %v199 = vrot.slane %v163, %v198
      %v201 = vadd.f32 %v193, %v199
      %v202 = vadd.f32 %v194, %v199
      %v203 = vmax.f32 %v201, 0.0
      %v204 = vmax.f32 %v202, 0.0
      %205 = vst [vmem:[#allocation7] sm:$0xff] %v203
      %206 = vst [vmem:[#allocation7 + $0x8] sm:$0xff] %v204
    $region37: #{tpu_custom_call.1} parent=1 // pred_fallthru
      _
    // Predicated region
    $region38: #{tpu_custom_call.1} parent=1 // pred_check
      _
    $region39: #{tpu_custom_call.1} parent=1 // pred_check_branch
      %208 = sbr.rel (0) target = $region41
    $region40: #{tpu_custom_call.1} parent=1 // pred_region
      %s210 = ssub.s32 256, 256
      %211 = vsyncadd [#allocation4], %s210
      %s212 = sshll.u32 [#allocation7], 4
      %s213 = int_to_ptr.vmem [resolvable:$true] %s212
      %218 = dma.vmem_to_hbm [thread:$0]  %s213, 256, %s4, [#allocation4], 128, 128, 8
    $region41: #{tpu_custom_call.1} parent=1 // pred_fallthru
      _
    // Predicated region
    $region42: #{tpu_custom_call.1} parent=1 // pred_check
      _
    $region43: #{tpu_custom_call.1} parent=1 // pred_check_branch
      %220 = sbr.rel (0) target = $region45
    $region44: #{tpu_custom_call.1} parent=1 // pred_region
      %221 = dma.done [#allocation4], 256
    $region45: #{tpu_custom_call.1} parent=1 // pred_fallthru
      _
    %222 = vsyncpa [#allocation3], 1
    %223 = vsyncpa [#allocation6], 1
    %224 = vsyncpa [#allocation4], 1

</llo_original>
